<compile_context>
chip_gen: v5e
topology: v5e:2x2
jax: 0.10.0
libtpu: 0.0.40
codegen_flags: <defaults>
</compile_context>

<pallas_src>
import math

import jax
import jax.numpy as jnp
from jax.experimental import pallas as pl
from jax.experimental.pallas import tpu as pltpu


# ---------------- configuration (small synthetic sizes) ----------------
N_HEADS   = 4
N_DIMS    = 32
TOTAL_EX  = 50
TOTAL_CAT = 10
SEQ_LEN   = 9            # pos_encode(seq_len - 1) -> effective sequence length L = 8
TIME_W    = 300
BATCH     = 2
L         = SEQ_LEN - 1  # 8
LN_EPS    = 1e-5

_NEG_INF  = -1e30


def _layernorm(x, g, b):
    mu = jnp.mean(x, axis=-1, keepdims=True)
    xc = x - mu
    var = jnp.mean(xc * xc, axis=-1, keepdims=True)
    return xc * jax.lax.rsqrt(var + LN_EPS) * g + b


# ---------------- Pallas wrapper + kernel ----------------
def multihead_with_ffn_pallas(q, kv, w_heads, b_qkv, w_ffn, vecs):
    """q, kv: (B, S, D) float32.  Returns (S, B, D) float32 (reference layout)."""
    B, S, D = q.shape
    H = N_HEADS
    dh = D // H
    BS = B * S
    M2 = 2 * BS

    # Stack query rows on top of key/value rows host-side: one clean 2-D input,
    # LN1 + the fused QKV projection then cover both in a single pass.
    x = jnp.concatenate(
        [q.reshape(BS, D), kv.reshape(BS, D)], axis=0).astype(jnp.float32)  # (2*BS, D)

    def kernel(x_ref, wh_ref, bqkv_ref, wf_ref, v_ref, out_ref):
        f32, bf16 = jnp.float32, jnp.bfloat16

        # ---- packed small f32 vectors --------------------------------------
        vec = v_ref[...]                                   # (8, D)
        ln1_g, ln1_b = vec[0:1], vec[1:2]
        ln2_g, ln2_b = vec[2:3], vec[3:4]
        bo, bf1, bf2 = vec[4:5], vec[5:6], vec[6:7]

        # ---- LN1 over the stacked [q ; kv] rows -----------------------------
        normed = _layernorm(x_ref[...], ln1_g, ln1_b)      # (2*BS, D) f32
        qn = normed[0:BS, :]                               # (BS, D), reused by residual

        # ---- fused QKV projection: ONE matmul, batched over heads only ------
        #   lhs (H, 2*BS, D) x rhs (H, 3*dh, D) -> (H, 2*BS, 3*dh), f32 accum
        nb = jnp.broadcast_to(normed.astype(bf16)[None], (H, M2, D))
        wqkv = wh_ref[:, 0:3 * dh, :]                      # (H, 3*dh, D) bf16
        dn_last = (((2,), (2,)), ((0,), (0,)))             # contract trailing dims
        proj = jax.lax.dot_general(nb, wqkv, dn_last, preferred_element_type=f32)

        bvec = bqkv_ref[...]                               # (H, 1, 3*dh) f32
        Q = proj[:, 0:BS, 0:dh]           + bvec[:, :, 0:dh]         # from q rows
        K = proj[:, BS:M2, dh:2 * dh]     + bvec[:, :, dh:2 * dh]    # from kv rows
        V = proj[:, BS:M2, 2 * dh:3 * dh] + bvec[:, :, 2 * dh:3 * dh]

        # ---- attention on the packed (B*S) sequence, block-diag causal mask -
        r = jax.lax.broadcasted_iota(jnp.int32, (BS, BS), 0)
        c = jax.lax.broadcasted_iota(jnp.int32, (BS, BS), 1)
        allowed = c <= r                                   # causal within the packed seq
        for t in range(S, BS, S):                          # same-batch (no int division)
            allowed = allowed & ((r < t) == (c < t))
        allowed = allowed[None]                            # (1, BS, BS)

        s = jax.lax.dot_general(Q.astype(bf16), K.astype(bf16), dn_last,
                                preferred_element_type=f32)   # (H, BS, BS)
        s = jnp.where(allowed, s, _NEG_INF)
        s = s - jnp.max(s, axis=-1, keepdims=True)
        p = jnp.exp(s)
        p = p * pl.reciprocal(jnp.sum(p, axis=-1, keepdims=True), approx=True)

        dn_mid = (((2,), (1,)), ((0,), (0,)))
        ctx = jax.lax.dot_general(p.astype(bf16), V.astype(bf16), dn_mid,
                                  preferred_element_type=f32)  # (H, BS, dh)

        # out-projection per head; head-sum == concat(heads) @ Wo^T
        wo = wh_ref[:, 3 * dh:4 * dh, :]                       # (H, dh, D) bf16
        ao = jax.lax.dot_general(ctx.astype(bf16), wo, dn_mid,
                                 preferred_element_type=f32)   # (H, BS, D)
        attn = jnp.sum(ao, axis=0) + bo                        # (BS, D)

        # ---- residual + LN2 + FFN -------------------------------------------
        x1 = attn + qn                                     # residual with normed query
        y = _layernorm(x1, ln2_g, ln2_b)
        h1 = jnp.maximum(
            jnp.dot(y.astype(bf16), wf_ref[0:D, :],
                    preferred_element_type=f32) + bf1, 0.0)
        ffn = jnp.dot(h1.astype(bf16), wf_ref[D:2 * D, :],
                      preferred_element_type=f32) + bf2

        # single unmasked full-ref store of a lane-dense (B*S, D) slab
        out_ref[...] = (ffn + y).astype(out_ref.dtype)

    def full_spec(shape):
        nd = len(shape)
        return pl.BlockSpec(shape, lambda i, nd=nd: (0,) * nd)

    out2d = pl.pallas_call(
        kernel,
        out_shape=jax.ShapeDtypeStruct((BS, D), jnp.float32),
        grid=(1,),                       # whole problem in one step: no per-step overhead
        in_specs=[full_spec(x.shape), full_spec(w_heads.shape),
                  full_spec(b_qkv.shape), full_spec(w_ffn.shape),
                  full_spec(vecs.shape)],
        out_specs=full_spec((BS, D)),
        compiler_params=pltpu.CompilerParams(dimension_semantics=("arbitrary",)),
    )(x, w_heads, b_qkv, w_ffn, vecs)

    # (B*S, D) -> (L, B, D): free XLA permute on the 2 KiB result.
    return out2d.reshape(B, S, D).transpose(1, 0, 2)


# ---------------- host-side (one-time) weight packing ----------------
def prepare_weights(params):
    """Pre-transpose / pre-split per head, fold 1/sqrt(dh) into Wq & bq, stack
    [Wq; Wk; Wv; Wo^T] per head into a single bf16 slab, FFN weights into another,
    QKV biases into one tiny f32 tensor and all D-wide vectors into one f32 slab."""
    D, H = N_DIMS, N_HEADS
    dh = D // H
    scale = 1.0 / math.sqrt(dh)

    in_w = params["in_proj_w"]                             # (3D, D) rows: [Wq; Wk; Wv]
    wq = (in_w[0:D] * scale).reshape(H, dh, D)             # 1/sqrt(dh) folded in
    wk = in_w[D:2 * D].reshape(H, dh, D)
    wv = in_w[2 * D:3 * D].reshape(H, dh, D)
    wo = params["out_proj_w"].T.reshape(H, dh, D)          # rows of Wo^T grouped per head
    w_heads = jnp.concatenate([wq, wk, wv, wo], axis=1).astype(jnp.bfloat16)  # (H, 4*dh, D)

    in_b = params["in_proj_b"]                             # (3, D)
    b_qkv = jnp.concatenate(
        [(in_b[0] * scale).reshape(H, 1, dh),
         in_b[1].reshape(H, 1, dh),
         in_b[2].reshape(H, 1, dh)], axis=-1).astype(jnp.float32)             # (H, 1, 3*dh)

    w_ffn = jnp.concatenate(
        [params["ffn_w1"].T, params["ffn_w2"].T], axis=0).astype(jnp.bfloat16)  # (2D, D)

    vecs = jnp.stack([
        params["ln1_g"][0], params["ln1_b"][0],
        params["ln2_g"][0], params["ln2_b"][0],
        params["out_proj_b"][0], params["ffn_b1"][0], params["ffn_b2"][0],
        jnp.zeros((D,), jnp.float32),
    ], axis=0).astype(jnp.float32)                         # (8, D)

    return w_heads, b_qkv, w_ffn, vecs


# ---------------- full EncoderBlock forward ----------------
def encoder_block_forward(params, input_e, category, elapse_time, response,
                          exercise, first_block=True):
    if first_block:
        # Embedding gathers + sums are left to XLA (no clean tiny-gather Pallas win here).
        _exe = params["exercise_embed"][input_e]           # (B, L, D)
        _cat = params["category_embed"][category]
        _etime = params["elapsetime_embed"][elapse_time]
        _resp = params["response_embed"][response]
        pos_ids = jnp.arange(SEQ_LEN - 1)                  # pos_encode(seq_len - 1)
        _pos = params["position_embed"][pos_ids][None]     # (1, L, D) broadcasts over batch
        interaction = _cat + _exe + _etime + _resp + _pos
    else:
        interaction = input_e

    w_heads, b_qkv, w_ffn, vecs = prepare_weights(params)
    # TODO(synk): dropout layers are identity (eval mode); training-mode dropout not implemented.
    return multihead_with_ffn_pallas(exercise.astype(jnp.float32),
                                     interaction.astype(jnp.float32),
                                     w_heads, b_qkv, w_ffn, vecs)


# ---------------- deterministic parameter init ----------------
def init_params(key):
    keys = jax.random.split(key, 16)
    D = N_DIMS

    def nrm(k, shape, scale=0.02):
        return (scale * jax.random.normal(k, shape)).astype(jnp.float32)

    params = {
        # embeddings (nn.Embedding default ~ N(0,1); scaled for stability)
        "exercise_embed":  nrm(keys[0], (TOTAL_EX, D), 1.0),
        "category_embed":  nrm(keys[1], (TOTAL_CAT, D), 1.0),
        "position_embed":  nrm(keys[2], (SEQ_LEN, D), 1.0),
        "response_embed":  nrm(keys[3], (TOTAL_EX, D), 1.0),
        "elapsetime_embed": nrm(keys[4], (TIME_W, D), 1.0),
        # layer norms (PyTorch init: gamma=1, beta=0) -- stored as (1, D)
        "ln1_g": jnp.ones((1, D), jnp.float32),
        "ln1_b": jnp.zeros((1, D), jnp.float32),
        "ln2_g": jnp.ones((1, D), jnp.float32),
        "ln2_b": jnp.zeros((1, D), jnp.float32),
        # nn.MultiheadAttention: in_proj (3D, D) + (3D,), out_proj (D, D) + (D,)
        "in_proj_w": nrm(keys[5], (3 * D, D), 1.0 / math.sqrt(D)),
        "in_proj_b": nrm(keys[6], (3, D), 0.01),           # (3D,) stored as (3, D)
        "out_proj_w": nrm(keys[7], (D, D), 1.0 / math.sqrt(D)),
        "out_proj_b": nrm(keys[8], (1, D), 0.01),
        # FFN: two D x D linears
        "ffn_w1": nrm(keys[9], (D, D), 1.0 / math.sqrt(D)),
        "ffn_b1": nrm(keys[10], (1, D), 0.01),
        "ffn_w2": nrm(keys[11], (D, D), 1.0 / math.sqrt(D)),
        "ffn_b2": nrm(keys[12], (1, D), 0.01),
    }
    return params


if __name__ == "__main__":
    master = jax.random.PRNGKey(0)
    pkey, ikey = jax.random.split(master)
    params = init_params(pkey)

    k1, k2, k3, k4, k5 = jax.random.split(ikey, 5)
    input_e = jax.random.randint(k1, (BATCH, L), 0, TOTAL_EX)
    category = jax.random.randint(k2, (BATCH, L), 0, TOTAL_CAT)
    elapse_time = jax.random.randint(k3, (BATCH, L), 0, TIME_W)
    response = jax.random.randint(k4, (BATCH, L), 0, TOTAL_EX)
    # q_input `exercise` is already an embedded float tensor in the reference model
    exercise = jax.random.normal(k5, (BATCH, L, N_DIMS), jnp.float32)

    out = encoder_block_forward(params, input_e, category, elapse_time,
                                response, exercise, first_block=True)
    out = jax.block_until_ready(out)
    assert out.shape == (L, BATCH, N_DIMS), out.shape
    assert bool(jnp.all(jnp.isfinite(out)))
    print("KERNEL_OK")
</pallas_src>

<mosaic_0001>
module attributes {stable_mosaic.version = 11 : i64} {
  func.func @kernel(%arg0: i32, %arg1: memref<32x32xf32, #tpu.memory_space<vmem>>, %arg2: memref<4x32x32xbf16, #tpu.memory_space<vmem>>, %arg3: memref<4x1x24xf32, #tpu.memory_space<vmem>>, %arg4: memref<64x32xbf16, #tpu.memory_space<vmem>>, %arg5: memref<8x32xf32, #tpu.memory_space<vmem>>, %arg6: memref<16x32xf32, #tpu.memory_space<vmem>>) attributes {dimension_semantics = [#tpu.dimension_semantics<arbitrary>], iteration_bounds = array<i64: 1>, scalar_prefetch = 0 : i64, scratch_operands = 0 : i64, tpu.core_type = #tpu.core_type<tc>, window_params = [{pipeline_mode = #tpu.pipeline_mode<synchronous>, transform_indices = @transform_0, window_bounds = array<i64: 32, 32>}, {pipeline_mode = #tpu.pipeline_mode<synchronous>, transform_indices = @transform_1, window_bounds = array<i64: 4, 32, 32>}, {pipeline_mode = #tpu.pipeline_mode<synchronous>, transform_indices = @transform_2, window_bounds = array<i64: 4, 1, 24>}, {pipeline_mode = #tpu.pipeline_mode<synchronous>, transform_indices = @transform_3, window_bounds = array<i64: 64, 32>}, {pipeline_mode = #tpu.pipeline_mode<synchronous>, transform_indices = @transform_4, window_bounds = array<i64: 8, 32>}, {pipeline_mode = #tpu.pipeline_mode<synchronous>, transform_indices = @transform_5, window_bounds = array<i64: 16, 32>}]} {
    %c0 = arith.constant 0 : index
    %c0_0 = arith.constant 0 : index
    %0 = vector.load %arg5[%c0, %c0_0] : memref<8x32xf32, #tpu.memory_space<vmem>>, vector<8x32xf32>
    %1 = vector.extract_strided_slice %0 {offsets = [0, 0], sizes = [1, 32], strides = [1, 1]} : vector<8x32xf32> to vector<1x32xf32>
    %2 = vector.extract_strided_slice %0 {offsets = [1, 0], sizes = [1, 32], strides = [1, 1]} : vector<8x32xf32> to vector<1x32xf32>
    %3 = vector.extract_strided_slice %0 {offsets = [2, 0], sizes = [1, 32], strides = [1, 1]} : vector<8x32xf32> to vector<1x32xf32>
    %4 = vector.extract_strided_slice %0 {offsets = [3, 0], sizes = [1, 32], strides = [1, 1]} : vector<8x32xf32> to vector<1x32xf32>
    %5 = vector.extract_strided_slice %0 {offsets = [4, 0], sizes = [1, 32], strides = [1, 1]} : vector<8x32xf32> to vector<1x32xf32>
    %6 = vector.extract_strided_slice %0 {offsets = [5, 0], sizes = [1, 32], strides = [1, 1]} : vector<8x32xf32> to vector<1x32xf32>
    %7 = vector.extract_strided_slice %0 {offsets = [6, 0], sizes = [1, 32], strides = [1, 1]} : vector<8x32xf32> to vector<1x32xf32>
    %c0_1 = arith.constant 0 : index
    %c0_2 = arith.constant 0 : index
    %8 = vector.load %arg1[%c0_1, %c0_2] : memref<32x32xf32, #tpu.memory_space<vmem>>, vector<32x32xf32>
    %cst = arith.constant dense<0.000000e+00> : vector<32xf32>
    %9 = vector.multi_reduction <add>, %8, %cst [1] : vector<32x32xf32> to vector<32xf32>
    %10 = vector.shape_cast %9 : vector<32xf32> to vector<32x1xf32>
    %cst_3 = arith.constant 3.200000e+01 : f32
    %11 = vector.broadcast %cst_3 : f32 to vector<32x1xf32>
    %12 = arith.divf %10, %11 : vector<32x1xf32>
    %13 = vector.broadcast %12 : vector<32x1xf32> to vector<32x32xf32>
    %14 = arith.subf %8, %13 : vector<32x32xf32>
    %15 = arith.mulf %14, %14 : vector<32x32xf32>
    %cst_4 = arith.constant dense<0.000000e+00> : vector<32xf32>
    %16 = vector.multi_reduction <add>, %15, %cst_4 [1] : vector<32x32xf32> to vector<32xf32>
    %17 = vector.shape_cast %16 : vector<32xf32> to vector<32x1xf32>
    %cst_5 = arith.constant 3.200000e+01 : f32
    %18 = vector.broadcast %cst_5 : f32 to vector<32x1xf32>
    %19 = arith.divf %17, %18 : vector<32x1xf32>
    %cst_6 = arith.constant 9.99999974E-6 : f32
    %20 = vector.broadcast %cst_6 : f32 to vector<32x1xf32>
    %21 = arith.addf %19, %20 : vector<32x1xf32>
    %22 = math.rsqrt %21 : vector<32x1xf32>
    %23 = vector.broadcast %22 : vector<32x1xf32> to vector<32x32xf32>
    %24 = arith.mulf %14, %23 : vector<32x32xf32>
    %25 = vector.broadcast %1 : vector<1x32xf32> to vector<32x32xf32>
    %26 = arith.mulf %24, %25 : vector<32x32xf32>
    %27 = vector.broadcast %2 : vector<1x32xf32> to vector<32x32xf32>
    %28 = arith.addf %26, %27 : vector<32x32xf32>
    %29 = vector.extract_strided_slice %28 {offsets = [0, 0], sizes = [16, 32], strides = [1, 1]} : vector<32x32xf32> to vector<16x32xf32>
    %30 = arith.truncf %28 : vector<32x32xf32> to vector<32x32xbf16>
    %31 = vector.shape_cast %30 : vector<32x32xbf16> to vector<1x32x32xbf16>
    %32 = vector.shape_cast %31 : vector<1x32x32xbf16> to vector<1x32x32xbf16>
    %33 = vector.broadcast %32 : vector<1x32x32xbf16> to vector<4x32x32xbf16>
    %c0_7 = arith.constant 0 : index
    %c0_8 = arith.constant 0 : index
    %c0_9 = arith.constant 0 : index
    %34 = vector.load %arg2[%c0_7, %c0_8, %c0_9] : memref<4x32x32xbf16, #tpu.memory_space<vmem>>, vector<4x24x32xbf16>
    %cst_10 = arith.constant dense<0.000000e+00> : vector<4x32x24xf32>
    %35 = tpu.matmul %33, %34, %cst_10 {dimension_numbers = #tpu.dot_dimension_numbers<[2], [2], [1], [1], [0, 0, 0, 1, 1, 1], [0], [0]>} : vector<4x32x32xbf16>, vector<4x24x32xbf16>, vector<4x32x24xf32> -> vector<4x32x24xf32>
    %c0_11 = arith.constant 0 : index
    %c0_12 = arith.constant 0 : index
    %c0_13 = arith.constant 0 : index
    %36 = vector.load %arg3[%c0_11, %c0_12, %c0_13] : memref<4x1x24xf32, #tpu.memory_space<vmem>>, vector<4x1x24xf32>
    %37 = vector.extract_strided_slice %35 {offsets = [0, 0, 0], sizes = [4, 16, 8], strides = [1, 1, 1]} : vector<4x32x24xf32> to vector<4x16x8xf32>
    %38 = vector.extract_strided_slice %36 {offsets = [0, 0, 0], sizes = [4, 1, 8], strides = [1, 1, 1]} : vector<4x1x24xf32> to vector<4x1x8xf32>
    %39 = vector.broadcast %38 : vector<4x1x8xf32> to vector<4x16x8xf32>
    %40 = arith.addf %37, %39 : vector<4x16x8xf32>
    %41 = vector.extract_strided_slice %35 {offsets = [0, 16, 8], sizes = [4, 16, 8], strides = [1, 1, 1]} : vector<4x32x24xf32> to vector<4x16x8xf32>
    %42 = vector.extract_strided_slice %36 {offsets = [0, 0, 8], sizes = [4, 1, 8], strides = [1, 1, 1]} : vector<4x1x24xf32> to vector<4x1x8xf32>
    %43 = vector.broadcast %42 : vector<4x1x8xf32> to vector<4x16x8xf32>
    %44 = arith.addf %41, %43 : vector<4x16x8xf32>
    %45 = vector.extract_strided_slice %35 {offsets = [0, 16, 16], sizes = [4, 16, 8], strides = [1, 1, 1]} : vector<4x32x24xf32> to vector<4x16x8xf32>
    %46 = vector.extract_strided_slice %36 {offsets = [0, 0, 16], sizes = [4, 1, 8], strides = [1, 1, 1]} : vector<4x1x24xf32> to vector<4x1x8xf32>
    %47 = vector.broadcast %46 : vector<4x1x8xf32> to vector<4x16x8xf32>
    %48 = arith.addf %45, %47 : vector<4x16x8xf32>
    %49 = tpu.iota {dimensions = array<i32: 0>} : vector<16x16xi32>
    %50 = tpu.iota {dimensions = array<i32: 1>} : vector<16x16xi32>
    %51 = arith.cmpi sle, %50, %49 : vector<16x16xi32>
    %c8_i32 = arith.constant 8 : i32
    %52 = vector.broadcast %c8_i32 : i32 to vector<16x16xi32>
    %53 = arith.cmpi slt, %49, %52 : vector<16x16xi32>
    %c8_i32_14 = arith.constant 8 : i32
    %54 = vector.broadcast %c8_i32_14 : i32 to vector<16x16xi32>
    %55 = arith.cmpi slt, %50, %54 : vector<16x16xi32>
    %56 = arith.xori %53, %55 : vector<16x16xi1>
    %cst_15 = arith.constant dense<true> : vector<16x16xi1>
    %57 = arith.xori %56, %cst_15 : vector<16x16xi1>
    %58 = arith.andi %51, %57 : vector<16x16xi1>
    %59 = vector.shape_cast %58 : vector<16x16xi1> to vector<1x16x16xi1>
    %60 = arith.truncf %40 : vector<4x16x8xf32> to vector<4x16x8xbf16>
    %61 = arith.truncf %44 : vector<4x16x8xf32> to vector<4x16x8xbf16>
    %cst_16 = arith.constant dense<0.000000e+00> : vector<4x16x16xf32>
    %62 = tpu.matmul %60, %61, %cst_16 {dimension_numbers = #tpu.dot_dimension_numbers<[2], [2], [1], [1], [0, 0, 0, 1, 1, 1], [0], [0]>} : vector<4x16x8xbf16>, vector<4x16x8xbf16>, vector<4x16x16xf32> -> vector<4x16x16xf32>
    %cst_17 = arith.constant -1.000000e+30 : f32
    %63 = vector.shape_cast %59 : vector<1x16x16xi1> to vector<1x16x16xi1>
    %64 = vector.broadcast %63 : vector<1x16x16xi1> to vector<4x16x16xi1>
    %65 = vector.broadcast %cst_17 : f32 to vector<4x16x16xf32>
    %66 = arith.select %64, %62, %65 : vector<4x16x16xi1>, vector<4x16x16xf32>
    %cst_18 = arith.constant dense<0xFF800000> : vector<4x16xf32>
    %67 = vector.multi_reduction <maximumf>, %66, %cst_18 [2] : vector<4x16x16xf32> to vector<4x16xf32>
    %68 = vector.shape_cast %67 : vector<4x16xf32> to vector<4x16x1xf32>
    %69 = vector.broadcast %68 : vector<4x16x1xf32> to vector<4x16x16xf32>
    %70 = arith.subf %66, %69 : vector<4x16x16xf32>
    %71 = math.exp %70 : vector<4x16x16xf32>
    %cst_19 = arith.constant dense<0.000000e+00> : vector<4x16xf32>
    %72 = vector.multi_reduction <add>, %71, %cst_19 [2] : vector<4x16x16xf32> to vector<4x16xf32>
    %73 = vector.shape_cast %72 : vector<4x16xf32> to vector<4x16x1xf32>
    %74 = tpu.reciprocal %73 {approx = true} : vector<4x16x1xf32> -> vector<4x16x1xf32>
    %75 = vector.broadcast %74 : vector<4x16x1xf32> to vector<4x16x16xf32>
    %76 = arith.mulf %71, %75 : vector<4x16x16xf32>
    %77 = arith.truncf %76 : vector<4x16x16xf32> to vector<4x16x16xbf16>
    %78 = arith.truncf %48 : vector<4x16x8xf32> to vector<4x16x8xbf16>
    %cst_20 = arith.constant dense<0.000000e+00> : vector<4x16x8xf32>
    %79 = tpu.matmul %77, %78, %cst_20 {dimension_numbers = #tpu.dot_dimension_numbers<[2], [1], [1], [2], [0, 0, 0, 1, 1, 2], [0], [0]>} : vector<4x16x16xbf16>, vector<4x16x8xbf16>, vector<4x16x8xf32> -> vector<4x16x8xf32>
    %c0_21 = arith.constant 0 : index
    %c24 = arith.constant 24 : index
    %c0_22 = arith.constant 0 : index
    %80 = vector.load %arg2[%c0_21, %c24, %c0_22] : memref<4x32x32xbf16, #tpu.memory_space<vmem>>, vector<4x8x32xbf16>
    %81 = arith.truncf %79 : vector<4x16x8xf32> to vector<4x16x8xbf16>
    %cst_23 = arith.constant dense<0.000000e+00> : vector<4x16x32xf32>
    %82 = tpu.matmul %81, %80, %cst_23 {dimension_numbers = #tpu.dot_dimension_numbers<[2], [1], [1], [2], [0, 0, 0, 1, 1, 2], [0], [0]>} : vector<4x16x8xbf16>, vector<4x8x32xbf16>, vector<4x16x32xf32> -> vector<4x16x32xf32>
    %cst_24 = arith.constant dense<0.000000e+00> : vector<16x32xf32>
    %83 = vector.multi_reduction <add>, %82, %cst_24 [0] : vector<4x16x32xf32> to vector<16x32xf32>
    %84 = vector.broadcast %5 : vector<1x32xf32> to vector<16x32xf32>
    %85 = arith.addf %83, %84 : vector<16x32xf32>
    %86 = arith.addf %85, %29 : vector<16x32xf32>
    %cst_25 = arith.constant dense<0.000000e+00> : vector<16xf32>
    %87 = vector.multi_reduction <add>, %86, %cst_25 [1] : vector<16x32xf32> to vector<16xf32>
    %88 = vector.shape_cast %87 : vector<16xf32> to vector<16x1xf32>
    %cst_26 = arith.constant 3.200000e+01 : f32
    %89 = vector.broadcast %cst_26 : f32 to vector<16x1xf32>
    %90 = arith.divf %88, %89 : vector<16x1xf32>
    %91 = vector.broadcast %90 : vector<16x1xf32> to vector<16x32xf32>
    %92 = arith.subf %86, %91 : vector<16x32xf32>
    %93 = arith.mulf %92, %92 : vector<16x32xf32>
    %cst_27 = arith.constant dense<0.000000e+00> : vector<16xf32>
    %94 = vector.multi_reduction <add>, %93, %cst_27 [1] : vector<16x32xf32> to vector<16xf32>
    %95 = vector.shape_cast %94 : vector<16xf32> to vector<16x1xf32>
    %cst_28 = arith.constant 3.200000e+01 : f32
    %96 = vector.broadcast %cst_28 : f32 to vector<16x1xf32>
    %97 = arith.divf %95, %96 : vector<16x1xf32>
    %cst_29 = arith.constant 9.99999974E-6 : f32
    %98 = vector.broadcast %cst_29 : f32 to vector<16x1xf32>
    %99 = arith.addf %97, %98 : vector<16x1xf32>
    %100 = math.rsqrt %99 : vector<16x1xf32>
    %101 = vector.broadcast %100 : vector<16x1xf32> to vector<16x32xf32>
    %102 = arith.mulf %92, %101 : vector<16x32xf32>
    %103 = vector.broadcast %3 : vector<1x32xf32> to vector<16x32xf32>
    %104 = arith.mulf %102, %103 : vector<16x32xf32>
    %105 = vector.broadcast %4 : vector<1x32xf32> to vector<16x32xf32>
    %106 = arith.addf %104, %105 : vector<16x32xf32>
    %107 = arith.truncf %106 : vector<16x32xf32> to vector<16x32xbf16>
    %c0_30 = arith.constant 0 : index
    %c0_31 = arith.constant 0 : index
    %108 = vector.load %arg4[%c0_30, %c0_31] : memref<64x32xbf16, #tpu.memory_space<vmem>>, vector<32x32xbf16>
    %cst_32 = arith.constant dense<0.000000e+00> : vector<16x32xf32>
    %109 = tpu.matmul %107, %108, %cst_32 {dimension_numbers = #tpu.dot_dimension_numbers<[1], [0], [0], [1], [0, 0, 1, 1], [], []>} : vector<16x32xbf16>, vector<32x32xbf16>, vector<16x32xf32> -> vector<16x32xf32>
    %110 = vector.broadcast %6 : vector<1x32xf32> to vector<16x32xf32>
    %111 = arith.addf %109, %110 : vector<16x32xf32>
    %cst_33 = arith.constant 0.000000e+00 : f32
    %112 = vector.broadcast %cst_33 : f32 to vector<16x32xf32>
    %113 = arith.maximumf %111, %112 : vector<16x32xf32>
    %114 = arith.truncf %113 : vector<16x32xf32> to vector<16x32xbf16>
    %c32 = arith.constant 32 : index
    %c0_34 = arith.constant 0 : index
    %115 = vector.load %arg4[%c32, %c0_34] : memref<64x32xbf16, #tpu.memory_space<vmem>>, vector<32x32xbf16>
    %cst_35 = arith.constant dense<0.000000e+00> : vector<16x32xf32>
    %116 = tpu.matmul %114, %115, %cst_35 {dimension_numbers = #tpu.dot_dimension_numbers<[1], [0], [0], [1], [0, 0, 1, 1], [], []>} : vector<16x32xbf16>, vector<32x32xbf16>, vector<16x32xf32> -> vector<16x32xf32>
    %117 = vector.broadcast %7 : vector<1x32xf32> to vector<16x32xf32>
    %118 = arith.addf %116, %117 : vector<16x32xf32>
    %119 = arith.addf %118, %106 : vector<16x32xf32>
    %c0_36 = arith.constant 0 : index
    %c0_37 = arith.constant 0 : index
    %120 = vector.load %arg6[%c0_36, %c0_37] : memref<16x32xf32, #tpu.memory_space<vmem>>, vector<16x32xf32>
    tpu.vector_store %arg6[%c0_36, %c0_37], %119 {strides = array<i32>} : memref<16x32xf32, #tpu.memory_space<vmem>>, vector<16x32xf32>,
    return
  }
  func.func @transform_0(%arg0: i32) -> (i32, i32) {
    %c0_i32 = arith.constant 0 : i32
    %c0_i32_0 = arith.constant 0 : i32
    %c0_i32_1 = arith.constant 0 : i32
    return %c0_i32, %c0_i32_0 : i32, i32
  }
  func.func @transform_1(%arg0: i32) -> (i32, i32, i32) {
    %c0_i32 = arith.constant 0 : i32
    %c0_i32_0 = arith.constant 0 : i32
    %c0_i32_1 = arith.constant 0 : i32
    %c0_i32_2 = arith.constant 0 : i32
    return %c0_i32, %c0_i32_0, %c0_i32_1 : i32, i32, i32
  }
  func.func @transform_2(%arg0: i32) -> (i32, i32, i32) {
    %c0_i32 = arith.constant 0 : i32
    %c0_i32_0 = arith.constant 0 : i32
    %c0_i32_1 = arith.constant 0 : i32
    %c0_i32_2 = arith.constant 0 : i32
    return %c0_i32, %c0_i32_0, %c0_i32_1 : i32, i32, i32
  }
  func.func @transform_3(%arg0: i32) -> (i32, i32) {
    %c0_i32 = arith.constant 0 : i32
    %c0_i32_0 = arith.constant 0 : i32
    %c0_i32_1 = arith.constant 0 : i32
    return %c0_i32, %c0_i32_0 : i32, i32
  }
  func.func @transform_4(%arg0: i32) -> (i32, i32) {
    %c0_i32 = arith.constant 0 : i32
    %c0_i32_0 = arith.constant 0 : i32
    %c0_i32_1 = arith.constant 0 : i32
    return %c0_i32, %c0_i32_0 : i32, i32
  }
  func.func @transform_5(%arg0: i32) -> (i32, i32) {
    %c0_i32 = arith.constant 0 : i32
    %c0_i32_0 = arith.constant 0 : i32
    %c0_i32_1 = arith.constant 0 : i32
    return %c0_i32, %c0_i32_0 : i32, i32
  }
}

</mosaic_0001>

<llo_original>
// kernel: tpu_custom_call.1
$region0: #{tpu_custom_call.1}
  #allocation0 [shape = 'u32[]', space=smem, size = 0x4, offset = 0x4, fixed_abs, tag = 'smem constant byte address 0x4 - core index']
  #allocation1 [shape = 'u32[72,128]{1,0:T(1,128)}', space=vmem, size = 0x9000, scoped, tag = 'internal scratch']
  %s0 = inlined_call_operand.vmem [shape: f32[32,32], index: 0, kind: input, shape index: {}]
  %s1 = inlined_call_operand.hbm [shape: bf16[4,32,32], index: 1, kind: input, shape index: {}]
  %s2 = inlined_call_operand.vmem [shape: f32[4,1,24], index: 2, kind: input, shape index: {}]
  %s3 = inlined_call_operand.vmem [shape: bf16[64,32], index: 3, kind: input, shape index: {}]
  %s4 = inlined_call_operand.vmem [shape: f32[8,32], index: 4, kind: input, shape index: {}]
  %s5 = inlined_call_operand.hbm [shape: f32[16,32], index: 5, kind: output, shape index: {}]
  %s6 = sld [smem:[#allocation0]]
  $region34: #{tpu_custom_call.1} parent=0
    _
  %s8 = ssub.s32 1, %s6
  %s9 = scalar_select 0, %s8, %s6
  $region1: #{tpu_custom_call.1} parent=0
    #allocation2 [shape = 'u8[32768]{0}', space=vmem, size = 0x8000, scoped, tag = 'input window, operand 1, single buffered']
    #allocation3 [shape = 's32[1]{0}', space=sflag, size = 0x4, scoped, tag = 'scoped memory for tpu_custom_call.1']
    #allocation4 [shape = 's32[1]{0}', space=sflag, size = 0x4, scoped, tag = 'scoped memory for tpu_custom_call.1']
    #allocation5 [shape = 'u8[8192]{0}', space=vmem, size = 0x2000, scoped, tag = 'output window, operand 0, single buffered']
    %10 = vsyncpa [#allocation3], 0
    %11 = vsyncpa [#allocation4], 0
    // Predicated region
    $region2: #{tpu_custom_call.1} parent=1 // pred_check
      _
    $region3: #{tpu_custom_call.1} parent=1 // pred_check_branch
      %13 = sbr.rel (0) target = $region5
    $region4: #{tpu_custom_call.1} parent=1 // pred_region
      _
    $region5: #{tpu_custom_call.1} parent=1 // pred_fallthru
      _
    // Predicated region
    $region6: #{tpu_custom_call.1} parent=1 // pred_check
      _
    $region7: #{tpu_custom_call.1} parent=1 // pred_check_branch
      %15 = sbr.rel (0) target = $region9
    $region8: #{tpu_custom_call.1} parent=1 // pred_region
      %17 = vsyncadd [#allocation3], 0
      %s18 = sshll.u32 %s1, 4
      %s19 = int_to_ptr.hbm [resolvable:$true] %s18
      %s20 = sshll.u32 [#allocation2], 4
      %s21 = int_to_ptr.vmem [resolvable:$true] %s20
      %26 = dma.hbm_to_vmem [thread:$0]  %s19, 1024, %s21, [#allocation3], 64, 64, 4
    $region9: #{tpu_custom_call.1} parent=1 // pred_fallthru
      _
    // Predicated region
    $region10: #{tpu_custom_call.1} parent=1 // pred_check
      _
    $region11: #{tpu_custom_call.1} parent=1 // pred_check_branch
      %28 = sbr.rel (0) target = $region13
    $region12: #{tpu_custom_call.1} parent=1 // pred_region
      _
    $region13: #{tpu_custom_call.1} parent=1 // pred_fallthru
      _
    // Predicated region
    $region14: #{tpu_custom_call.1} parent=1 // pred_check
      _
    $region15: #{tpu_custom_call.1} parent=1 // pred_check_branch
      %30 = sbr.rel (0) target = $region17
    $region16: #{tpu_custom_call.1} parent=1 // pred_region
      _
    $region17: #{tpu_custom_call.1} parent=1 // pred_fallthru
      _
    // Predicated region
    $region18: #{tpu_custom_call.1} parent=1 // pred_check
      _
    $region19: #{tpu_custom_call.1} parent=1 // pred_check_branch
      %32 = sbr.rel (0) target = $region21
    $region20: #{tpu_custom_call.1} parent=1 // pred_region
      _
    $region21: #{tpu_custom_call.1} parent=1 // pred_fallthru
      _
    // Predicated region
    $region22: #{tpu_custom_call.1} parent=1 // pred_check
      _
    $region23: #{tpu_custom_call.1} parent=1 // pred_check_branch
      %34 = sbr.rel (0) target = $region25
    $region24: #{tpu_custom_call.1} parent=1 // pred_region
      %36 = dma.done [#allocation3], 1024
    $region25: #{tpu_custom_call.1} parent=1 // pred_fallthru
      _
    %v38 = vld [vmem:[%s4] sm:$0xff]
    %v39 = vld [vmem:[%s0] sm:$0xff]
    %v40 = vld [vmem:[%s0 + $0x8] sm:$0xff]
    %v41 = vld [vmem:[%s0 + $0x10] sm:$0xff]
    %v42 = vld [vmem:[%s0 + $0x18] sm:$0xff]
    %vm43 = vcmask 261120
    %v44 = vsel %vm43, %v39, 0.0
    %45 = vadd.xlane.f32.xlu0 %v44
    %v46 = vpop.xlane.xlu0 %45
    %v47 = vsel %vm43, %v40, 0.0
    %48 = vadd.xlane.f32.xlu0 %v47
    %v49 = vpop.xlane.xlu0 %48
    %v50 = vsel %vm43, %v41, 0.0
    %51 = vadd.xlane.f32.xlu0 %v50
    %v52 = vpop.xlane.xlu0 %51
    %v53 = vsel %vm43, %v42, 0.0
    %54 = vadd.xlane.f32.xlu0 %v53
    %v55 = vpop.xlane.xlu0 %54
    %v56 = vrcp.pop 32.0
    %v57 = vmul.f32 32.0, %v56
    %v58 = vsub.f32 1.0, %v57
    %v59 = vmul.f32 %v56, %v58
    %v60 = vadd.f32 %v56, %v59
    %vm61 = vweird.f32 %v56
    %v62 = vsel %vm61, %v56, %v60
    %v63 = vmul.f32 %v46, %v62
    %v64 = vmul.f32 %v49, %v62
    %v65 = vmul.f32 %v52, %v62
    %v66 = vmul.f32 %v55, %v62
    %v67 = vsub.f32 %v39, %v63
    %v68 = vsub.f32 %v40, %v64
    %v69 = vsub.f32 %v41, %v65
    %v70 = vsub.f32 %v42, %v66
    %v71 = vmul.f32 %v67, %v67
    %v72 = vmul.f32 %v68, %v68
    %v73 = vmul.f32 %v69, %v69
    %v74 = vmul.f32 %v70, %v70
    %v75 = vsel %vm43, %v71, 0.0
    %76 = vadd.xlane.f32.xlu0 %v75
    %v77 = vpop.xlane.xlu0 %76
    %v78 = vsel %vm43, %v72, 0.0
    %79 = vadd.xlane.f32.xlu0 %v78
    %v80 = vpop.xlane.xlu0 %79
    %v81 = vsel %vm43, %v73, 0.0
    %82 = vadd.xlane.f32.xlu0 %v81
    %v83 = vpop.xlane.xlu0 %82
    %v84 = vsel %vm43, %v74, 0.0
    %85 = vadd.xlane.f32.xlu0 %v84
    %v86 = vpop.xlane.xlu0 %85
    %v87 = vmul.f32 %v77, %v62
    %v88 = vmul.f32 %v80, %v62
    %v89 = vmul.f32 %v83, %v62
    %v90 = vmul.f32 %v86, %v62
    %v91 = vadd.f32 %v87, 1e-05
    %v92 = vadd.f32 %v88, 1e-05
    %v93 = vadd.f32 %v89, 1e-05
    %v94 = vadd.f32 %v90, 1e-05
    %v95 = vrsqrt.pop %v91
    %v96 = vmul.f32 %v95, %v91
    %v97 = vmul.f32 %v96, %v95
    %v98 = vmul.f32 0.5, %v97
    %v99 = vsub.f32 1.5, %v98
    %v100 = vmul.f32 %v95, %v99
    %vm101 = vweird.f32 %v91
    %vm102 = vweird.f32 %v95
    %vm103 = vmor %vm101, %vm102
    %v104 = vsel %vm103, %v95, %v100
    %v105 = vrsqrt.pop %v92
    %v106 = vmul.f32 %v105, %v92
    %v107 = vmul.f32 %v106, %v105
    %v108 = vmul.f32 0.5, %v107
    %v109 = vsub.f32 1.5, %v108
    %v110 = vmul.f32 %v105, %v109
    %vm111 = vweird.f32 %v92
    %vm112 = vweird.f32 %v105
    %vm113 = vmor %vm111, %vm112
    %v114 = vsel %vm113, %v105, %v110
    %v115 = vrsqrt.pop %v93
    %v116 = vmul.f32 %v115, %v93
    %v117 = vmul.f32 %v116, %v115
    %v118 = vmul.f32 0.5, %v117
    %v119 = vsub.f32 1.5, %v118
    %v120 = vmul.f32 %v115, %v119
    %vm121 = vweird.f32 %v93
    %vm122 = vweird.f32 %v115
    %vm123 = vmor %vm121, %vm122
    %v124 = vsel %vm123, %v115, %v120
    %v125 = vrsqrt.pop %v94
    %v126 = vmul.f32 %v125, %v94
    %v127 = vmul.f32 %v126, %v125
    %v128 = vmul.f32 0.5, %v127
    %v129 = vsub.f32 1.5, %v128
    %v130 = vmul.f32 %v125, %v129
    %vm131 = vweird.f32 %v94
    %vm132 = vweird.f32 %v125
    %vm133 = vmor %vm131, %vm132
    %v134 = vsel %vm133, %v125, %v130
    %v135 = vmul.f32 %v67, %v104
    %v136 = vmul.f32 %v68, %v114
    %v137 = vmul.f32 %v69, %v124
    %v138 = vmul.f32 %v70, %v134
    %v139 = vperm.slane %v38, 0
    %v140 = vmul.f32 %v135, %v139
    %v141 = vmul.f32 %v136, %v139
    %v142 = vmul.f32 %v137, %v139
    %v143 = vmul.f32 %v138, %v139
    %v144 = vperm.slane %v38, 1
    %v145 = vadd.f32 %v140, %v144
    %v146 = vadd.f32 %v141, %v144
    %v147 = vadd.f32 %v142, %v144
    %v148 = vadd.f32 %v143, %v144
    %v149 = vpack.c.bf16 %v145, %v145
    %v150 = vpack.c.bf16 %v146, %v146
    %v151 = vpack.c.bf16 %v147, %v147
    %v152 = vpack.c.bf16 %v148, %v148
    %v153 = vld [vmem:[#allocation2] sm:$0xf]
    %v154 = vld [vmem:[#allocation2 + $0x4] sm:$0xf]
    %v155 = vld [vmem:[#allocation2 + $0x8] sm:$0xf]
    %v156 = vld [vmem:[#allocation2 + $0x10] sm:$0xf]
    %v157 = vld [vmem:[#allocation2 + $0x14] sm:$0xf]
    %v158 = vld [vmem:[#allocation2 + $0x18] sm:$0xf]
    %v159 = vld [vmem:[#allocation2 + $0x20] sm:$0xf]
    %v160 = vld [vmem:[#allocation2 + $0x24] sm:$0xf]
    %v161 = vld [vmem:[#allocation2 + $0x28] sm:$0xf]
    %v162 = vld [vmem:[#allocation2 + $0x30] sm:$0xf]
    %v163 = vld [vmem:[#allocation2 + $0x34] sm:$0xf]
    %v164 = vld [vmem:[#allocation2 + $0x38] sm:$0xf]
    %v169 = vunpack.c.l.b16 %v149
    %v170 = vunpack.c.l.b16 %v150
    %v171 = vunpack.c.l.b16 %v151
    %v172 = vunpack.c.l.b16 %v152
    %v173 = vpack.c.b16 %v170, %v169
    %v174 = vpack.c.b16 %v172, %v171
    %v178 = vunpack.c.l.b16 %v153
    %v179 = vunpack.c.l.b16 %v154
    %v180 = vunpack.c.l.b16 %v155
    %v181 = vpack.c.b16 %v179, %v178
    %v182 = vpack.c.b16 %v180, %v180
    %v184 = vsel %vm43, %v173, 0
    %v187 = vsel %vm43, %v174, 0
    %v190 = vsel %vm43, %v181, 0
    %v193 = vsel %vm43, %v182, 0
    %195 = vmatpush.bf16.xpose.msra.mxu0 0
    %196 = vmatpush.bf16.xpose.msra.mxu0 0
    %197 = vmatpush.bf16.xpose.msra.mxu0 0
    %198 = vmatpush.bf16.xpose.msra.mxu0 0
    %199 = vmatpush.bf16.xpose.msra.mxu0 0
    %200 = vmatpush.bf16.xpose.msra.mxu0 0
    %201 = vmatpush.bf16.xpose.msra.mxu0 %v193
    %202 = vmatpush.bf16.xpose.msra.mxu0 %v190
    %203 = vmatmul.bf16.gmra.mxu0 %v184
    %v204 = vpop.f32.mrf.mxu0
    %v205 = vadd.f32 0.0, %v204
    %v206 = vpop.f32.mrf.mxu0
    %v207 = vadd.f32 0.0, %v206
    %208 = vmatmul.bf16.gmra.mxu0 %v187
    %v209 = vpop.f32.mrf.mxu0
    %v210 = vadd.f32 0.0, %v209
    %v211 = vpop.f32.mrf.mxu0
    %v212 = vadd.f32 0.0, %v211
    %213 = vdwg.mxu0
    %v217 = vunpack.c.l.b16 %v156
    %v218 = vunpack.c.l.b16 %v157
    %v219 = vunpack.c.l.b16 %v158
    %v220 = vpack.c.b16 %v218, %v217
    %v221 = vpack.c.b16 %v219, %v219
    %v223 = vsel %vm43, %v220, 0
    %v226 = vsel %vm43, %v221, 0
    %228 = vmatpush.bf16.xpose.msra.mxu0 0
    %229 = vmatpush.bf16.xpose.msra.mxu0 0
    %230 = vmatpush.bf16.xpose.msra.mxu0 0
    %231 = vmatpush.bf16.xpose.msra.mxu0 0
    %232 = vmatpush.bf16.xpose.msra.mxu0 0
    %233 = vmatpush.bf16.xpose.msra.mxu0 0
    %234 = vmatpush.bf16.xpose.msra.mxu0 %v226
    %235 = vmatpush.bf16.xpose.msra.mxu0 %v223
    %236 = vmatmul.bf16.gmra.mxu0 %v184
    %v237 = vpop.f32.mrf.mxu0
    %v238 = vadd.f32 0.0, %v237
    %v239 = vpop.f32.mrf.mxu0
    %v240 = vadd.f32 0.0, %v239
    %241 = vmatmul.bf16.gmra.mxu0 %v187
    %v242 = vpop.f32.mrf.mxu0
    %v243 = vadd.f32 0.0, %v242
    %v244 = vpop.f32.mrf.mxu0
    %v245 = vadd.f32 0.0, %v244
    %246 = vdwg.mxu0
    %v250 = vunpack.c.l.b16 %v159
    %v251 = vunpack.c.l.b16 %v160
    %v252 = vunpack.c.l.b16 %v161
    %v253 = vpack.c.b16 %v251, %v250
    %v254 = vpack.c.b16 %v252, %v252
    %v256 = vsel %vm43, %v253, 0
    %v259 = vsel %vm43, %v254, 0
    %261 = vmatpush.bf16.xpose.msra.mxu0 0
    %262 = vmatpush.bf16.xpose.msra.mxu0 0
    %263 = vmatpush.bf16.xpose.msra.mxu0 0
    %264 = vmatpush.bf16.xpose.msra.mxu0 0
    %265 = vmatpush.bf16.xpose.msra.mxu0 0
    %266 = vmatpush.bf16.xpose.msra.mxu0 0
    %267 = vmatpush.bf16.xpose.msra.mxu0 %v259
    %268 = vmatpush.bf16.xpose.msra.mxu0 %v256
    %269 = vmatmul.bf16.gmra.mxu0 %v184
    %v270 = vpop.f32.mrf.mxu0
    %v271 = vadd.f32 0.0, %v270
    %v272 = vpop.f32.mrf.mxu0
    %v273 = vadd.f32 0.0, %v272
    %274 = vmatmul.bf16.gmra.mxu0 %v187
    %v275 = vpop.f32.mrf.mxu0
    %v276 = vadd.f32 0.0, %v275
    %v277 = vpop.f32.mrf.mxu0
    %v278 = vadd.f32 0.0, %v277
    %279 = vdwg.mxu0
    %v283 = vunpack.c.l.b16 %v162
    %v284 = vunpack.c.l.b16 %v163
    %v285 = vunpack.c.l.b16 %v164
    %v286 = vpack.c.b16 %v284, %v283
    %v287 = vpack.c.b16 %v285, %v285
    %v289 = vsel %vm43, %v286, 0
    %v292 = vsel %vm43, %v287, 0
    %294 = vmatpush.bf16.xpose.msra.mxu0 0
    %295 = vmatpush.bf16.xpose.msra.mxu0 0
    %296 = vmatpush.bf16.xpose.msra.mxu0 0
    %297 = vmatpush.bf16.xpose.msra.mxu0 0
    %298 = vmatpush.bf16.xpose.msra.mxu0 0
    %299 = vmatpush.bf16.xpose.msra.mxu0 0
    %300 = vmatpush.bf16.xpose.msra.mxu0 %v292
    %301 = vmatpush.bf16.xpose.msra.mxu0 %v289
    %302 = vmatmul.bf16.gmra.mxu0 %v184
    %v303 = vpop.f32.mrf.mxu0
    %v304 = vadd.f32 0.0, %v303
    %v305 = vpop.f32.mrf.mxu0
    %v306 = vadd.f32 0.0, %v305
    %307 = vmatmul.bf16.gmra.mxu0 %v187
    %v308 = vpop.f32.mrf.mxu0
    %v309 = vadd.f32 0.0, %v308
    %v310 = vpop.f32.mrf.mxu0
    %v311 = vadd.f32 0.0, %v310
    %312 = vdwg.mxu0
    %v313 = vld [vmem:[%s2] sm:$0x1]
    %v314 = vld [vmem:[%s2 + $0x1] sm:$0x1]
    %v315 = vld [vmem:[%s2 + $0x2] sm:$0x1]
    %v316 = vld [vmem:[%s2 + $0x3] sm:$0x1]
    %v321 = vperm.slane %v313, 0
    %v322 = vperm.slane %v314, 0
    %v323 = vperm.slane %v315, 0
    %v324 = vperm.slane %v316, 0
    %v329 = vadd.f32 %v205, %v321
    %v330 = vadd.f32 %v207, %v321
    %v331 = vadd.f32 %v238, %v322
    %v332 = vadd.f32 %v240, %v322
    %v333 = vadd.f32 %v271, %v323
    %v334 = vadd.f32 %v273, %v323
    %v335 = vadd.f32 %v304, %v324
    %v336 = vadd.f32 %v306, %v324
    %v337 = vadd.f32 %v210, %v321
    %v338 = vadd.f32 %v212, %v321
    %v339 = vadd.f32 %v243, %v322
    %v340 = vadd.f32 %v245, %v322
    %v341 = vadd.f32 %v276, %v323
    %v342 = vadd.f32 %v278, %v323
    %v343 = vadd.f32 %v309, %v324
    %v344 = vadd.f32 %v311, %v324
    %v345 = vlaneseq
    %v346 = vshrl.u32 %v345, 7
    %v347 = vadd.s32 %v346, 8
    %v348 = vlaneseq
    %v349 = vand.u32 %v348, 127
    %vm350 = vcmp.le.s32.totalorder %v349, %v346
    %vm351 = vcmp.le.s32.totalorder %v349, %v347
    %vm352 = vcmp.lt.s32.totalorder %v346, 8
    %vm353 = vcmp.lt.s32.totalorder %v347, 8
    %vm354 = vcmp.lt.s32.totalorder %v349, 8
    %vm355 = vmxor %vm352, %vm354
    %vm356 = vmxor %vm353, %vm354
    %vm357 = vmxor %vm355, 1
    %vm358 = vmxor %vm356, 1
    %vm359 = vmand %vm350, %vm357
    %vm360 = vmand %vm351, %vm358
    %v361 = vpack.c.bf16 %v329, %v329
    %v362 = vpack.c.bf16 %v330, %v330
    %v363 = vpack.c.bf16 %v331, %v331
    %v364 = vpack.c.bf16 %v332, %v332
    %v365 = vpack.c.bf16 %v333, %v333
    %v366 = vpack.c.bf16 %v334, %v334
    %v367 = vpack.c.bf16 %v335, %v335
    %v368 = vpack.c.bf16 %v336, %v336
    %v369 = vpack.c.bf16 %v337, %v337
    %v370 = vpack.c.bf16 %v338, %v338
    %v371 = vpack.c.bf16 %v339, %v339
    %v372 = vpack.c.bf16 %v340, %v340
    %v373 = vpack.c.bf16 %v341, %v341
    %v374 = vpack.c.bf16 %v342, %v342
    %v375 = vpack.c.bf16 %v343, %v343
    %v376 = vpack.c.bf16 %v344, %v344
    %v379 = vunpack.c.l.b16 %v361
    %v380 = vunpack.c.l.b16 %v362
    %v381 = vpack.c.b16 %v380, %v379
    %v384 = vunpack.c.l.b16 %v369
    %v385 = vunpack.c.l.b16 %v370
    %v386 = vpack.c.b16 %v385, %v384
    %387 = vrot.lane.b32.xlu0 %v386, 120
    %v388 = vpop.permute.xlu0 %387
    %vm389 = vcmask 64512
    %v391 = vsel %vm389, %v381, 0
    %v394 = vsel %vm389, %v388, 0
    %396 = vmatpush.bf16.xpose.msra.mxu0 0
    %397 = vmatpush.bf16.xpose.msra.mxu0 0
    %398 = vmatpush.bf16.xpose.msra.mxu0 0
    %399 = vmatpush.bf16.xpose.msra.mxu0 0
    %400 = vmatpush.bf16.xpose.msra.mxu0 0
    %401 = vmatpush.bf16.xpose.msra.mxu0 0
    %402 = vmatpush.bf16.xpose.msra.mxu0 0
    %403 = vmatpush.bf16.xpose.msra.mxu0 %v394
    %404 = vmatmul.bf16.gmra.mxu0 %v391
    %v405 = vpop.f32.mrf.mxu0
    %v406 = vadd.f32 0.0, %v405
    %v407 = vpop.f32.mrf.mxu0
    %v408 = vadd.f32 0.0, %v407
    %409 = vdwg.mxu0
    %v412 = vunpack.c.l.b16 %v363
    %v413 = vunpack.c.l.b16 %v364
    %v414 = vpack.c.b16 %v413, %v412
    %v417 = vunpack.c.l.b16 %v371
    %v418 = vunpack.c.l.b16 %v372
    %v419 = vpack.c.b16 %v418, %v417
    %420 = vrot.lane.b32.xlu0 %v419, 120
    %v421 = vpop.permute.xlu0 %420
    %v423 = vsel %vm389, %v414, 0
    %v426 = vsel %vm389, %v421, 0
    %428 = vmatpush.bf16.xpose.msra.mxu0 0
    %429 = vmatpush.bf16.xpose.msra.mxu0 0
    %430 = vmatpush.bf16.xpose.msra.mxu0 0
    %431 = vmatpush.bf16.xpose.msra.mxu0 0
    %432 = vmatpush.bf16.xpose.msra.mxu0 0
    %433 = vmatpush.bf16.xpose.msra.mxu0 0
    %434 = vmatpush.bf16.xpose.msra.mxu0 0
    %435 = vmatpush.bf16.xpose.msra.mxu0 %v426
    %436 = vmatmul.bf16.gmra.mxu0 %v423
    %v437 = vpop.f32.mrf.mxu0
    %v438 = vadd.f32 0.0, %v437
    %v439 = vpop.f32.mrf.mxu0
    %v440 = vadd.f32 0.0, %v439
    %441 = vdwg.mxu0
    %v444 = vunpack.c.l.b16 %v365
    %v445 = vunpack.c.l.b16 %v366
    %v446 = vpack.c.b16 %v445, %v444
    %v449 = vunpack.c.l.b16 %v373
    %v450 = vunpack.c.l.b16 %v374
    %v451 = vpack.c.b16 %v450, %v449
    %452 = vrot.lane.b32.xlu0 %v451, 120
    %v453 = vpop.permute.xlu0 %452
    %v455 = vsel %vm389, %v446, 0
    %v458 = vsel %vm389, %v453, 0
    %460 = vmatpush.bf16.xpose.msra.mxu0 0
    %461 = vmatpush.bf16.xpose.msra.mxu0 0
    %462 = vmatpush.bf16.xpose.msra.mxu0 0
    %463 = vmatpush.bf16.xpose.msra.mxu0 0
    %464 = vmatpush.bf16.xpose.msra.mxu0 0
    %465 = vmatpush.bf16.xpose.msra.mxu0 0
    %466 = vmatpush.bf16.xpose.msra.mxu0 0
    %467 = vmatpush.bf16.xpose.msra.mxu0 %v458
    %468 = vmatmul.bf16.gmra.mxu0 %v455
    %v469 = vpop.f32.mrf.mxu0
    %v470 = vadd.f32 0.0, %v469
    %v471 = vpop.f32.mrf.mxu0
    %v472 = vadd.f32 0.0, %v471
    %473 = vdwg.mxu0
    %v476 = vunpack.c.l.b16 %v367
    %v477 = vunpack.c.l.b16 %v368
    %v478 = vpack.c.b16 %v477, %v476
    %v481 = vunpack.c.l.b16 %v375
    %v482 = vunpack.c.l.b16 %v376
    %v483 = vpack.c.b16 %v482, %v481
    %484 = vrot.lane.b32.xlu0 %v483, 120
    %v485 = vpop.permute.xlu0 %484
    %v487 = vsel %vm389, %v478, 0
    %v490 = vsel %vm389, %v485, 0
    %492 = vmatpush.bf16.xpose.msra.mxu0 0
    %493 = vmatpush.bf16.xpose.msra.mxu0 0
    %494 = vmatpush.bf16.xpose.msra.mxu0 0
    %495 = vmatpush.bf16.xpose.msra.mxu0 0
    %496 = vmatpush.bf16.xpose.msra.mxu0 0
    %497 = vmatpush.bf16.xpose.msra.mxu0 0
    %498 = vmatpush.bf16.xpose.msra.mxu0 0
    %499 = vmatpush.bf16.xpose.msra.mxu0 %v490
    %500 = vmatmul.bf16.gmra.mxu0 %v487
    %v501 = vpop.f32.mrf.mxu0
    %v502 = vadd.f32 0.0, %v501
    %v503 = vpop.f32.mrf.mxu0
    %v504 = vadd.f32 0.0, %v503
    %505 = vdwg.mxu0
    %v506 = vsel %vm359, 1, 0
    %v507 = vsel %vm360, 1, 0
    %vm508 = vcmp.eq.s32.totalorder %v506, 1
    %vm509 = vcmp.eq.s32.totalorder %v507, 1
    %v510 = vsel %vm508, %v406, -1e+30
    %v511 = vsel %vm509, %v408, -1e+30
    %v512 = vsel %vm508, %v438, -1e+30
    %v513 = vsel %vm509, %v440, -1e+30
    %v514 = vsel %vm508, %v470, -1e+30
    %v515 = vsel %vm509, %v472, -1e+30
    %v516 = vsel %vm508, %v502, -1e+30
    %v517 = vsel %vm509, %v504, -1e+30
    %vm518 = vcmask 130048
    %v519 = vsel %vm518, %v510, -inf
    %520 = vmax.xlane.f32.xlu0 %v519
    %v521 = vpop.xlane.xlu0 %520
    %v522 = vsel %vm518, %v511, -inf
    %523 = vmax.xlane.f32.xlu0 %v522
    %v524 = vpop.xlane.xlu0 %523
    %v525 = vsel %vm518, %v512, -inf
    %526 = vmax.xlane.f32.xlu0 %v525
    %v527 = vpop.xlane.xlu0 %526
    %v528 = vsel %vm518, %v513, -inf
    %529 = vmax.xlane.f32.xlu0 %v528
    %v530 = vpop.xlane.xlu0 %529
    %v531 = vsel %vm518, %v514, -inf
    %532 = vmax.xlane.f32.xlu0 %v531
    %v533 = vpop.xlane.xlu0 %532
    %v534 = vsel %vm518, %v515, -inf
    %535 = vmax.xlane.f32.xlu0 %v534
    %v536 = vpop.xlane.xlu0 %535
    %v537 = vsel %vm518, %v516, -inf
    %538 = vmax.xlane.f32.xlu0 %v537
    %v539 = vpop.xlane.xlu0 %538
    %v540 = vsel %vm518, %v517, -inf
    %541 = vmax.xlane.f32.xlu0 %v540
    %v542 = vpop.xlane.xlu0 %541
    %v543 = vsub.f32 %v510, %v521
    %v544 = vsub.f32 %v511, %v524
    %v545 = vsub.f32 %v512, %v527
    %v546 = vsub.f32 %v513, %v530
    %v547 = vsub.f32 %v514, %v533
    %v548 = vsub.f32 %v515, %v536
    %v549 = vsub.f32 %v516, %v539
    %v550 = vsub.f32 %v517, %v542
    %v551 = vmul.f32 %v543, 1.442695
    %v552 = vpow.pop %v551
    %v553 = vmul.f32 %v544, 1.442695
    %v554 = vpow.pop %v553
    %v555 = vmul.f32 %v545, 1.442695
    %v556 = vpow.pop %v555
    %v557 = vmul.f32 %v546, 1.442695
    %v558 = vpow.pop %v557
    %v559 = vmul.f32 %v547, 1.442695
    %v560 = vpow.pop %v559
    %v561 = vmul.f32 %v548, 1.442695
    %v562 = vpow.pop %v561
    %v563 = vmul.f32 %v549, 1.442695
    %v564 = vpow.pop %v563
    %v565 = vmul.f32 %v550, 1.442695
    %v566 = vpow.pop %v565
    %v567 = vsel %vm518, %v552, 0.0
    %568 = vadd.xlane.f32.xlu0 %v567
    %v569 = vpop.xlane.xlu0 %568
    %v570 = vsel %vm518, %v554, 0.0
    %571 = vadd.xlane.f32.xlu0 %v570
    %v572 = vpop.xlane.xlu0 %571
    %v573 = vsel %vm518, %v556, 0.0
    %574 = vadd.xlane.f32.xlu0 %v573
    %v575 = vpop.xlane.xlu0 %574
    %v576 = vsel %vm518, %v558, 0.0
    %577 = vadd.xlane.f32.xlu0 %v576
    %v578 = vpop.xlane.xlu0 %577
    %v579 = vsel %vm518, %v560, 0.0
    %580 = vadd.xlane.f32.xlu0 %v579
    %v581 = vpop.xlane.xlu0 %580
    %v582 = vsel %vm518, %v562, 0.0
    %583 = vadd.xlane.f32.xlu0 %v582
    %v584 = vpop.xlane.xlu0 %583
    %v585 = vsel %vm518, %v564, 0.0
    %586 = vadd.xlane.f32.xlu0 %v585
    %v587 = vpop.xlane.xlu0 %586
    %v588 = vsel %vm518, %v566, 0.0
    %589 = vadd.xlane.f32.xlu0 %v588
    %v590 = vpop.xlane.xlu0 %589
    %v591 = vrcp.pop %v569
    %v592 = vrcp.pop %v572
    %v593 = vrcp.pop %v575
    %v594 = vrcp.pop %v578
    %v595 = vrcp.pop %v581
    %v596 = vrcp.pop %v584
    %v597 = vrcp.pop %v587
    %v598 = vrcp.pop %v590
    %v599 = vmul.f32 %v552, %v591
    %v600 = vmul.f32 %v554, %v592
    %v601 = vmul.f32 %v556, %v593
    %v602 = vmul.f32 %v558, %v594
    %v603 = vmul.f32 %v560, %v595
    %v604 = vmul.f32 %v562, %v596
    %v605 = vmul.f32 %v564, %v597
    %v606 = vmul.f32 %v566, %v598
    %v607 = vpack.c.bf16 %v599, %v599
    %v608 = vpack.c.bf16 %v600, %v600
    %v609 = vpack.c.bf16 %v601, %v601
    %v610 = vpack.c.bf16 %v602, %v602
    %v611 = vpack.c.bf16 %v603, %v603
    %v612 = vpack.c.bf16 %v604, %v604
    %v613 = vpack.c.bf16 %v605, %v605
    %v614 = vpack.c.bf16 %v606, %v606
    %v617 = vunpack.c.l.b16 %v607
    %v618 = vunpack.c.l.b16 %v608
    %v619 = vpack.c.b16 %v618, %v617
    %620 = vrot.lane.b32.xlu0 %v386, 112
    %v621 = vpop.permute.xlu0 %620
    %v624 = vsel %vm518, %v619, 0
    %626 = vmatpush.bf16.msra.mxu0 0
    %627 = vmatpush.bf16.msra.mxu0 0
    %628 = vmatpush.bf16.msra.mxu0 0
    %629 = vmatpush.bf16.msra.mxu0 0
    %630 = vmatpush.bf16.msra.mxu0 0
    %631 = vmatpush.bf16.msra.mxu0 0
    %632 = vmatpush.bf16.msra.mxu0 0
    %633 = vmatpush.bf16.msra.mxu0 %v621
    %634 = vmatmul.bf16.gmra.mxu0 %v624
    %v635 = vpop.f32.mrf.mxu0
    %v636 = vadd.f32 0.0, %v635
    %v637 = vpop.f32.mrf.mxu0
    %v638 = vadd.f32 0.0, %v637
    %639 = vdwg.mxu0
    %v642 = vunpack.c.l.b16 %v609
    %v643 = vunpack.c.l.b16 %v610
    %v644 = vpack.c.b16 %v643, %v642
    %645 = vrot.lane.b32.xlu0 %v419, 112
    %v646 = vpop.permute.xlu0 %645
    %v649 = vsel %vm518, %v644, 0
    %651 = vmatpush.bf16.msra.mxu0 0
    %652 = vmatpush.bf16.msra.mxu0 0
    %653 = vmatpush.bf16.msra.mxu0 0
    %654 = vmatpush.bf16.msra.mxu0 0
    %655 = vmatpush.bf16.msra.mxu0 0
    %656 = vmatpush.bf16.msra.mxu0 0
    %657 = vmatpush.bf16.msra.mxu0 0
    %658 = vmatpush.bf16.msra.mxu0 %v646
    %659 = vmatmul.bf16.gmra.mxu0 %v649
    %v660 = vpop.f32.mrf.mxu0
    %v661 = vadd.f32 0.0, %v660
    %v662 = vpop.f32.mrf.mxu0
    %v663 = vadd.f32 0.0, %v662
    %664 = vdwg.mxu0
    %v667 = vunpack.c.l.b16 %v611
    %v668 = vunpack.c.l.b16 %v612
    %v669 = vpack.c.b16 %v668, %v667
    %670 = vrot.lane.b32.xlu0 %v451, 112
    %v671 = vpop.permute.xlu0 %670
    %v674 = vsel %vm518, %v669, 0
    %676 = vmatpush.bf16.msra.mxu0 0
    %677 = vmatpush.bf16.msra.mxu0 0
    %678 = vmatpush.bf16.msra.mxu0 0
    %679 = vmatpush.bf16.msra.mxu0 0
    %680 = vmatpush.bf16.msra.mxu0 0
    %681 = vmatpush.bf16.msra.mxu0 0
    %682 = vmatpush.bf16.msra.mxu0 0
    %683 = vmatpush.bf16.msra.mxu0 %v671
    %684 = vmatmul.bf16.gmra.mxu0 %v674
    %v685 = vpop.f32.mrf.mxu0
    %v686 = vadd.f32 0.0, %v685
    %v687 = vpop.f32.mrf.mxu0
    %v688 = vadd.f32 0.0, %v687
    %689 = vdwg.mxu0
    %v692 = vunpack.c.l.b16 %v613
    %v693 = vunpack.c.l.b16 %v614
    %v694 = vpack.c.b16 %v693, %v692
    %695 = vrot.lane.b32.xlu0 %v483, 112
    %v696 = vpop.permute.xlu0 %695
    %v699 = vsel %vm518, %v694, 0
    %701 = vmatpush.bf16.msra.mxu0 0
    %702 = vmatpush.bf16.msra.mxu0 0
    %703 = vmatpush.bf16.msra.mxu0 0
    %704 = vmatpush.bf16.msra.mxu0 0
    %705 = vmatpush.bf16.msra.mxu0 0
    %706 = vmatpush.bf16.msra.mxu0 0
    %707 = vmatpush.bf16.msra.mxu0 0
    %708 = vmatpush.bf16.msra.mxu0 %v696
    %709 = vmatmul.bf16.gmra.mxu0 %v699
    %v710 = vpop.f32.mrf.mxu0
    %v711 = vadd.f32 0.0, %v710
    %v712 = vpop.f32.mrf.mxu0
    %v713 = vadd.f32 0.0, %v712
    %714 = vdwg.mxu0
    %v715 = vld [vmem:[#allocation2 + $0xc] sm:$0xf]
    %v716 = vld [vmem:[#allocation2 + $0x1c] sm:$0xf]
    %v717 = vld [vmem:[#allocation2 + $0x2c] sm:$0xf]
    %v718 = vld [vmem:[#allocation2 + $0x3c] sm:$0xf]
    %v719 = vpack.c.bf16 %v636, %v636
    %v720 = vpack.c.bf16 %v638, %v638
    %v721 = vpack.c.bf16 %v661, %v661
    %v722 = vpack.c.bf16 %v663, %v663
    %v723 = vpack.c.bf16 %v686, %v686
    %v724 = vpack.c.bf16 %v688, %v688
    %v725 = vpack.c.bf16 %v711, %v711
    %v726 = vpack.c.bf16 %v713, %v713
    %v729 = vunpack.c.l.b16 %v719
    %v730 = vunpack.c.l.b16 %v720
    %v731 = vpack.c.b16 %v730, %v729
    %v733 = vsel %vm389, %v731, 0
    %vm735 = vcmask 1043456
    %v737 = vsel %vm735, %v715, 0
    %739 = vmatpush.bf16.msra.mxu0 0
    %740 = vmatpush.bf16.msra.mxu0 0
    %741 = vmatpush.bf16.msra.mxu0 0
    %742 = vmatpush.bf16.msra.mxu0 0
    %743 = vmatpush.bf16.msra.mxu0 0
    %744 = vmatpush.bf16.msra.mxu0 0
    %745 = vmatpush.bf16.msra.mxu0 0
    %746 = vmatpush.bf16.msra.mxu0 %v737
    %747 = vmatmul.bf16.gmra.mxu0 %v733
    %v748 = vpop.f32.mrf.mxu0
    %v749 = vadd.f32 0.0, %v748
    %v750 = vpop.f32.mrf.mxu0
    %v751 = vadd.f32 0.0, %v750
    %752 = vdwg.mxu0
    %v755 = vunpack.c.l.b16 %v721
    %v756 = vunpack.c.l.b16 %v722
    %v757 = vpack.c.b16 %v756, %v755
    %v759 = vsel %vm389, %v757, 0
    %v762 = vsel %vm735, %v716, 0
    %764 = vmatpush.bf16.msra.mxu0 0
    %765 = vmatpush.bf16.msra.mxu0 0
    %766 = vmatpush.bf16.msra.mxu0 0
    %767 = vmatpush.bf16.msra.mxu0 0
    %768 = vmatpush.bf16.msra.mxu0 0
    %769 = vmatpush.bf16.msra.mxu0 0
    %770 = vmatpush.bf16.msra.mxu0 0
    %771 = vmatpush.bf16.msra.mxu0 %v762
    %772 = vmatmul.bf16.gmra.mxu0 %v759
    %v773 = vpop.f32.mrf.mxu0
    %v774 = vadd.f32 0.0, %v773
    %v775 = vpop.f32.mrf.mxu0
    %v776 = vadd.f32 0.0, %v775
    %777 = vdwg.mxu0
    %v780 = vunpack.c.l.b16 %v723
    %v781 = vunpack.c.l.b16 %v724
    %v782 = vpack.c.b16 %v781, %v780
    %v784 = vsel %vm389, %v782, 0
    %v787 = vsel %vm735, %v717, 0
    %789 = vmatpush.bf16.msra.mxu0 0
    %790 = vmatpush.bf16.msra.mxu0 0
    %791 = vmatpush.bf16.msra.mxu0 0
    %792 = vmatpush.bf16.msra.mxu0 0
    %793 = vmatpush.bf16.msra.mxu0 0
    %794 = vmatpush.bf16.msra.mxu0 0
    %795 = vmatpush.bf16.msra.mxu0 0
    %796 = vmatpush.bf16.msra.mxu0 %v787
    %797 = vmatmul.bf16.gmra.mxu0 %v784
    %v798 = vpop.f32.mrf.mxu0
    %v799 = vadd.f32 0.0, %v798
    %v800 = vpop.f32.mrf.mxu0
    %v801 = vadd.f32 0.0, %v800
    %802 = vdwg.mxu0
    %v805 = vunpack.c.l.b16 %v725
    %v806 = vunpack.c.l.b16 %v726
    %v807 = vpack.c.b16 %v806, %v805
    %v809 = vsel %vm389, %v807, 0
    %v812 = vsel %vm735, %v718, 0
    %814 = vmatpush.bf16.msra.mxu0 0
    %815 = vmatpush.bf16.msra.mxu0 0
    %816 = vmatpush.bf16.msra.mxu0 0
    %817 = vmatpush.bf16.msra.mxu0 0
    %818 = vmatpush.bf16.msra.mxu0 0
    %819 = vmatpush.bf16.msra.mxu0 0
    %820 = vmatpush.bf16.msra.mxu0 0
    %821 = vmatpush.bf16.msra.mxu0 %v812
    %822 = vmatmul.bf16.gmra.mxu0 %v809
    %v823 = vpop.f32.mrf.mxu0
    %v824 = vadd.f32 0.0, %v823
    %v825 = vpop.f32.mrf.mxu0
    %v826 = vadd.f32 0.0, %v825
    %827 = vdwg.mxu0
    %v828 = vsel %vm43, %v749, 0.0
    %v829 = vsel %vm43, %v774, 0.0
    %v830 = vadd.f32 %v828, %v829
    %v831 = vsel %vm43, %v799, 0.0
    %v832 = vadd.f32 %v830, %v831
    %v833 = vsel %vm43, %v824, 0.0
    %v834 = vadd.f32 %v832, %v833
    %v835 = vsel %vm43, %v751, 0.0
    %v836 = vsel %vm43, %v776, 0.0
    %v837 = vadd.f32 %v835, %v836
    %v838 = vsel %vm43, %v801, 0.0
    %v839 = vadd.f32 %v837, %v838
    %v840 = vsel %vm43, %v826, 0.0
    %v841 = vadd.f32 %v839, %v840
    %v842 = vperm.slane %v38, 4
    %v843 = vadd.f32 %v834, %v842
    %v844 = vadd.f32 %v841, %v842
    %v845 = vadd.f32 %v843, %v145
    %v846 = vadd.f32 %v844, %v146
    %v847 = vsel %vm43, %v845, 0.0
    %848 = vadd.xlane.f32.xlu0 %v847
    %v849 = vpop.xlane.xlu0 %848
    %v850 = vsel %vm43, %v846, 0.0
    %851 = vadd.xlane.f32.xlu0 %v850
    %v852 = vpop.xlane.xlu0 %851
    %v853 = vmul.f32 %v849, %v62
    %v854 = vmul.f32 %v852, %v62
    %v855 = vsub.f32 %v845, %v853
    %v856 = vsub.f32 %v846, %v854
    %v857 = vmul.f32 %v855, %v855
    %v858 = vmul.f32 %v856, %v856
    %v859 = vsel %vm43, %v857, 0.0
    %860 = vadd.xlane.f32.xlu0 %v859
    %v861 = vpop.xlane.xlu0 %860
    %v862 = vsel %vm43, %v858, 0.0
    %863 = vadd.xlane.f32.xlu0 %v862
    %v864 = vpop.xlane.xlu0 %863
    %v865 = vmul.f32 %v861, %v62
    %v866 = vmul.f32 %v864, %v62
    %v867 = vadd.f32 %v865, 1e-05
    %v868 = vadd.f32 %v866, 1e-05
    %v869 = vrsqrt.pop %v867
    %v870 = vmul.f32 %v869, %v867
    %v871 = vmul.f32 %v870, %v869
    %v872 = vmul.f32 0.5, %v871
    %v873 = vsub.f32 1.5, %v872
    %v874 = vmul.f32 %v869, %v873
    %vm875 = vweird.f32 %v867
    %vm876 = vweird.f32 %v869
    %vm877 = vmor %vm875, %vm876
    %v878 = vsel %vm877, %v869, %v874
    %v879 = vrsqrt.pop %v868
    %v880 = vmul.f32 %v879, %v868
    %v881 = vmul.f32 %v880, %v879
    %v882 = vmul.f32 0.5, %v881
    %v883 = vsub.f32 1.5, %v882
    %v884 = vmul.f32 %v879, %v883
    %vm885 = vweird.f32 %v868
    %vm886 = vweird.f32 %v879
    %vm887 = vmor %vm885, %vm886
    %v888 = vsel %vm887, %v879, %v884
    %v889 = vmul.f32 %v855, %v878
    %v890 = vmul.f32 %v856, %v888
    %v891 = vperm.slane %v38, 2
    %v892 = vmul.f32 %v889, %v891
    %v893 = vmul.f32 %v890, %v891
    %v894 = vperm.slane %v38, 3
    %v895 = vadd.f32 %v892, %v894
    %v896 = vadd.f32 %v893, %v894
    %v897 = vpack.c.bf16 %v896, %v895
    %v898 = vld [vmem:[%s3] sm:$0xf]
    %v899 = vld [vmem:[%s3 + $0x4] sm:$0xf]
    %v900 = vld [vmem:[%s3 + $0x8] sm:$0xf]
    %v901 = vld [vmem:[%s3 + $0xc] sm:$0xf]
    %v902 = vperm.slane %v38, 5
    %v907 = vunpack.c.l.b16 %v898
    %v908 = vunpack.c.l.b16 %v899
    %v909 = vunpack.c.l.b16 %v900
    %v910 = vunpack.c.l.b16 %v901
    %v911 = vpack.c.b16 %v908, %v907
    %v912 = vpack.c.b16 %v910, %v909
    %v916 = vsel %vm43, %v897, 0
    %918 = vmatpush.bf16.msra.mxu0 0
    %919 = vmatpush.bf16.msra.mxu0 0
    %920 = vmatpush.bf16.msra.mxu0 0
    %921 = vmatpush.bf16.msra.mxu0 0
    %922 = vmatpush.bf16.msra.mxu0 0
    %923 = vmatpush.bf16.msra.mxu0 0
    %924 = vmatpush.bf16.msra.mxu0 %v912
    %925 = vmatpush.bf16.msra.mxu0 %v911
    %926 = vmatmul.bf16.gmra.mxu0 %v916
    %v927 = vpop.f32.mrf.mxu0
    %v928 = vadd.f32 %v902, %v927
    %v929 = vpop.f32.mrf.mxu0
    %v930 = vadd.f32 %v902, %v929
    %931 = vdwg.mxu0
    %v932 = vmax.f32 %v928, 0.0
    %v933 = vmax.f32 %v930, 0.0
    %v934 = vpack.c.bf16 %v933, %v932
    %v935 = vld [vmem:[%s3 + $0x10] sm:$0xf]
    %v936 = vld [vmem:[%s3 + $0x14] sm:$0xf]
    %v937 = vld [vmem:[%s3 + $0x18] sm:$0xf]
    %v938 = vld [vmem:[%s3 + $0x1c] sm:$0xf]
    %v939 = vperm.slane %v38, 6
    %v944 = vunpack.c.l.b16 %v935
    %v945 = vunpack.c.l.b16 %v936
    %v946 = vunpack.c.l.b16 %v937
    %v947 = vunpack.c.l.b16 %v938
    %v948 = vpack.c.b16 %v945, %v944
    %v949 = vpack.c.b16 %v947, %v946
    %v953 = vsel %vm43, %v934, 0
    %955 = vmatpush.bf16.msra.mxu0 0
    %956 = vmatpush.bf16.msra.mxu0 0
    %957 = vmatpush.bf16.msra.mxu0 0
    %958 = vmatpush.bf16.msra.mxu0 0
    %959 = vmatpush.bf16.msra.mxu0 0
    %960 = vmatpush.bf16.msra.mxu0 0
    %961 = vmatpush.bf16.msra.mxu0 %v949
    %962 = vmatpush.bf16.msra.mxu0 %v948
    %963 = vmatmul.bf16.gmra.mxu0 %v953
    %v964 = vpop.f32.mrf.mxu0
    %v965 = vadd.f32 %v939, %v964
    %v966 = vpop.f32.mrf.mxu0
    %v967 = vadd.f32 %v939, %v966
    %968 = vdwg.mxu0
    %v969 = vadd.f32 %v965, %v895
    %v970 = vadd.f32 %v967, %v896
    %971 = vst.msk [vmem:[#allocation5] sm:$0xff] %vm43, %v969
    %972 = vst.msk [vmem:[#allocation5 + $0x8] sm:$0xff] %vm43, %v970
    // Predicated region
    $region26: #{tpu_custom_call.1} parent=1 // pred_check
      _
    $region27: #{tpu_custom_call.1} parent=1 // pred_check_branch
      %974 = sbr.rel (0) target = $region29
    $region28: #{tpu_custom_call.1} parent=1 // pred_region
      %976 = vsyncadd [#allocation4], 0
      %s977 = sshll.u32 [#allocation5], 4
      %s978 = int_to_ptr.vmem [resolvable:$true] %s977
      %s979 = sshll.u32 %s5, 4
      %s980 = int_to_ptr.hbm [resolvable:$true] %s979
      %985 = dma.vmem_to_hbm [thread:$0]  %s978, 256, %s980, [#allocation4], 128, 128, 8
    $region29: #{tpu_custom_call.1} parent=1 // pred_fallthru
      _
    // Predicated region
    $region30: #{tpu_custom_call.1} parent=1 // pred_check
      _
    $region31: #{tpu_custom_call.1} parent=1 // pred_check_branch
      %987 = sbr.rel (0) target = $region33
    $region32: #{tpu_custom_call.1} parent=1 // pred_region
      %989 = dma.done [#allocation4], 256
    $region33: #{tpu_custom_call.1} parent=1 // pred_fallthru
      _
    %990 = vsyncpa [#allocation3], 1
    %991 = vsyncpa [#allocation4], 1

</llo_original>
